<compile_context>
chip_gen: v5e
topology: v5e:2x2
jax: 0.10.0
libtpu: 0.0.40
codegen_flags: <defaults>
</compile_context>

<pallas_src>
import functools

import numpy as np
import jax
import jax.numpy as jnp
from jax.experimental import pallas as pl
from jax.experimental.pallas import tpu as pltpu

PI = 3.141592653589793


def _round_up(x, m):
    return ((x + m - 1) // m) * m


# ----------------------------- Pallas kernel --------------------------------
def _mlp_kernel(xt_ref, mc_ref, w1_ref, w23_ref, b123_ref, w4_ref, b4_ref,
                o_ref, *, negative_slope):
    f32 = jnp.float32

    # Packed positional-mapping constants: row0 = coef (2^i * pi * scale, or
    # `scale` for the identity block), row1 = identity-block mask, row2 = cos mask.
    coef = mc_ref[0:1, :]        # (1, Dmap)
    sel_id = mc_ref[1:2, :]
    sel_cos = mc_ref[2:3, :]

    t = xt_ref[...] * coef                                   # (TM, Dmap)
    # NOTE: separate sin/cos kept on purpose (see header comment).
    h = (sel_id * t
         + sel_cos * jnp.cos(t)
         + (1.0 - sel_id - sel_cos) * jnp.sin(t))            # 1/scale folded into W1

    def leaky(v):
        # valid for 0 < negative_slope < 1
        return jnp.maximum(v, negative_slope * v)

    h = leaky(jnp.dot(h, w1_ref[...], preferred_element_type=f32) + b123_ref[0:1, :])
    h = leaky(jnp.dot(h, w23_ref[0], preferred_element_type=f32) + b123_ref[1:2, :])
    h = leaky(jnp.dot(h, w23_ref[1], preferred_element_type=f32) + b123_ref[2:3, :])
    o_ref[...] = (jnp.dot(h, w4_ref[...], preferred_element_type=f32)
                  + b4_ref[...]).astype(o_ref.dtype)


# --------------------------- constants / params -----------------------------
@functools.lru_cache(maxsize=None)
def _build_mapping_constants(input_dim, L, scale):
    """One packed (3, D*(2L+1)) f32 buffer: [coef; sel_identity; sel_cos],
    laid out to match torch.cat([x, sin0, cos0, sin1, cos1, ...], dim=-1)."""
    D = input_dim
    nblk = 2 * L + 1
    mc = np.zeros((3, D * nblk), np.float32)
    for g in range(nblk):
        s = slice(g * D, (g + 1) * D)
        if g == 0:
            mc[0, s] = scale            # identity block keeps x*scale (1/scale in W1)
            mc[1, s] = 1.0
        else:
            i = (g - 1) // 2
            mc[0, s] = np.float32(2.0 ** i * PI) * scale
            if (g - 1) % 2 == 1:        # order is sin, cos, sin, cos, ...
                mc[2, s] = 1.0
    return jnp.asarray(mc)


def init_mlp_params(key, input_dim, output_dim, h_dim, L):
    """PyTorch-like uniform(-1/sqrt(fan_in), 1/sqrt(fan_in)) init.
    Weights stored transposed: (in_features, out_features)."""
    map_dim = input_dim * (2 * L + 1)
    dims = [(map_dim, h_dim), (h_dim, h_dim), (h_dim, h_dim), (h_dim, output_dim)]
    params = []
    for fan_in, fan_out in dims:
        key, kw, kb = jax.random.split(key, 3)
        bound = 1.0 / np.sqrt(fan_in)
        W = jax.random.uniform(kw, (fan_in, fan_out), jnp.float32, -bound, bound)
        b = jax.random.uniform(kb, (1, fan_out), jnp.float32, -bound, bound)
        params.append((W, b))
    return params


def prepare_params(params, *, input_dim, L=7, scale=1.0):
    """Pack / pad raw params once (host side); returns device-resident buffers."""
    (w1, b1), (w2, b2), (w3, b3), (w4, b4) = params
    h_dim = w1.shape[1]
    output_dim = w4.shape[1]
    dmap = input_dim * (2 * L + 1)
    assert w1.shape[0] == dmap

    out_pad = max(128, _round_up(output_dim, 128))   # lane-dense output slab
    w1f = jnp.asarray(w1, jnp.float32) / scale        # fold trailing 1/scale of mapping
    w23 = jnp.stack([jnp.asarray(w2, jnp.float32), jnp.asarray(w3, jnp.float32)])
    b123 = jnp.concatenate([jnp.reshape(b1, (1, h_dim)),
                            jnp.reshape(b2, (1, h_dim)),
                            jnp.reshape(b3, (1, h_dim))], axis=0)
    w4p = jnp.zeros((h_dim, out_pad), jnp.float32).at[:, :output_dim].set(
        jnp.asarray(w4, jnp.float32))
    b4p = jnp.zeros((1, out_pad), jnp.float32).at[:, :output_dim].set(
        jnp.reshape(jnp.asarray(b4, jnp.float32), (1, output_dim)))
    mconst = _build_mapping_constants(input_dim, L, float(scale))
    return {"mconst": mconst, "w1": w1f, "w23": w23, "b123": b123,
            "w4p": w4p, "b4p": b4p,
            "input_dim": input_dim, "output_dim": output_dim, "L": L}


# ------------------------------- wrapper -------------------------------------
@functools.partial(jax.jit,
                   static_argnames=("output_dim", "negative_slope", "block_rows"))
def _mlp_pallas(x2d, mconst, w1, w23, b123, w4p, b4p, *,
                output_dim, negative_slope=0.2, block_rows=256):
    m, d = x2d.shape
    dmap = mconst.shape[1]
    nblk = dmap // d
    h_dim = w1.shape[1]
    out_pad = w4p.shape[1]

    block_rows = max(8, (block_rows // 8) * 8)
    tm = block_rows if m > block_rows else _round_up(m, 8)
    m_pad = _round_up(m, tm)

    # Positional-mapping replication done by a cheap wrapper-side tile
    # (removes the serial one-hot matmul + its DMA from the kernel).
    xt = jnp.tile(x2d.astype(jnp.float32), (1, nblk))
    if m_pad != m:
        xt = jnp.pad(xt, ((0, m_pad - m), (0, 0)))

    kernel = functools.partial(_mlp_kernel, negative_slope=negative_slope)
    out = pl.pallas_call(
        kernel,
        out_shape=jax.ShapeDtypeStruct((m_pad, out_pad), jnp.float32),
        grid=(m_pad // tm,),
        in_specs=[
            pl.BlockSpec((tm, dmap), lambda i: (i, 0)),
            pl.BlockSpec((3, dmap), lambda i: (0, 0)),
            pl.BlockSpec((dmap, h_dim), lambda i: (0, 0)),
            pl.BlockSpec((2, h_dim, h_dim), lambda i: (0, 0, 0)),
            pl.BlockSpec((3, h_dim), lambda i: (0, 0)),
            pl.BlockSpec((h_dim, out_pad), lambda i: (0, 0)),
            pl.BlockSpec((1, out_pad), lambda i: (0, 0)),
        ],
        out_specs=pl.BlockSpec((tm, out_pad), lambda i: (i, 0)),
        compiler_params=pltpu.CompilerParams(
            dimension_semantics=("parallel",)),   # megacore sharding on v7x
    )(xt, mconst, w1, w23, b123, w4p, b4p)
    return out[:m, :output_dim]


def mlp_forward(x, prepared, *, negative_slope=0.2, block_rows=256):
    """Module-faithful forward: x.view([1, -1]) -> (1, output_dim)."""
    x_flat = jnp.reshape(jnp.asarray(x, jnp.float32), (1, -1))
    assert x_flat.shape[1] == prepared["input_dim"]
    return _mlp_pallas(x_flat, prepared["mconst"], prepared["w1"], prepared["w23"],
                       prepared["b123"], prepared["w4p"], prepared["b4p"],
                       output_dim=prepared["output_dim"],
                       negative_slope=negative_slope, block_rows=block_rows)


def mlp_forward_batched(xs, prepared, *, negative_slope=0.2, block_rows=256):
    """Throughput path: (N, input_dim) -> (N, output_dim) — N independent points
    per pallas_call (amortizes fixed overhead, fills MXU rows)."""
    xs = jnp.asarray(xs, jnp.float32)
    assert xs.ndim == 2 and xs.shape[1] == prepared["input_dim"]
    return _mlp_pallas(xs, prepared["mconst"], prepared["w1"], prepared["w23"],
                       prepared["b123"], prepared["w4p"], prepared["b4p"],
                       output_dim=prepared["output_dim"],
                       negative_slope=negative_slope, block_rows=block_rows)


# --------------------------- pure-JAX reference -------------------------------
def mlp_reference(x2d, params, *, L=7, scale=1.0, negative_slope=0.2):
    x = jnp.asarray(x2d, jnp.float32) * scale
    h = [x]
    for i in range(L):
        h.append(jnp.sin(2 ** i * PI * x))
        h.append(jnp.cos(2 ** i * PI * x))
    x = jnp.concatenate(h, axis=-1) / scale

    def leaky(v):
        return jnp.where(v > 0, v, negative_slope * v)

    (w1, b1), (w2, b2), (w3, b3), (w4, b4) = params
    x = leaky(x @ w1 + b1)
    x = leaky(x @ w2 + b2)
    x = leaky(x @ w3 + b3)
    return x @ w4 + b4


# --------------------------------- main ---------------------------------------
if __name__ == "__main__":
    # Small shapes: MLP(input_dim=8, output_dim=4, h_dim=32, L=7)
    INPUT_DIM, OUTPUT_DIM, H_DIM, L, SCALE = 8, 4, 32, 7, 1.0

    key = jax.random.PRNGKey(0)
    kx, kb, kp = jax.random.split(key, 3)
    params = init_mlp_params(kp, INPUT_DIM, OUTPUT_DIM, H_DIM, L)
    prepared = prepare_params(params, input_dim=INPUT_DIM, L=L, scale=SCALE)

    # 1) module-faithful path (x.view([1, -1]))
    x = jax.random.normal(kx, (2, 4), jnp.float32)        # flattens to (1, 8)
    out = jax.block_until_ready(mlp_forward(x, prepared))
    ref = mlp_reference(jnp.reshape(x, (1, -1)), params, L=L, scale=SCALE)
    np.testing.assert_allclose(np.asarray(out), np.asarray(ref), rtol=1e-5, atol=1e-5)
    assert out.shape == (1, OUTPUT_DIM)

    # 2) batched path: many points per pallas_call (perf-review item #1)
    xs = jax.random.normal(kb, (64, INPUT_DIM), jnp.float32)
    outs = jax.block_until_ready(mlp_forward_batched(xs, prepared))
    refs = mlp_reference(xs, params, L=L, scale=SCALE)
    # slightly looser: f32 sin/cos of |t| up to ~2^L*pi*|x| (argument reduction)
    np.testing.assert_allclose(np.asarray(outs), np.asarray(refs), rtol=1e-4, atol=1e-4)
    assert outs.shape == (64, OUTPUT_DIM)

    print("KERNEL_OK")
</pallas_src>

<mosaic_0001>
module attributes {stable_mosaic.version = 11 : i64} {
  func.func @_mlp_kernel(%arg0: i32, %arg1: memref<8x120xf32, #tpu.memory_space<vmem>>, %arg2: memref<3x120xf32, #tpu.memory_space<vmem>>, %arg3: memref<120x32xf32, #tpu.memory_space<vmem>>, %arg4: memref<2x32x32xf32, #tpu.memory_space<vmem>>, %arg5: memref<3x32xf32, #tpu.memory_space<vmem>>, %arg6: memref<32x128xf32, #tpu.memory_space<vmem>>, %arg7: memref<1x128xf32, #tpu.memory_space<vmem>>, %arg8: memref<8x128xf32, #tpu.memory_space<vmem>>) attributes {dimension_semantics = [#tpu.dimension_semantics<parallel>], iteration_bounds = array<i64: 1>, scalar_prefetch = 0 : i64, scratch_operands = 0 : i64, tpu.core_type = #tpu.core_type<tc>, window_params = [{transform_indices = @transform_0, window_bounds = array<i64: 8, 120>}, {pipeline_mode = #tpu.pipeline_mode<synchronous>, transform_indices = @transform_1, window_bounds = array<i64: 3, 120>}, {pipeline_mode = #tpu.pipeline_mode<synchronous>, transform_indices = @transform_2, window_bounds = array<i64: 120, 32>}, {pipeline_mode = #tpu.pipeline_mode<synchronous>, transform_indices = @transform_3, window_bounds = array<i64: 2, 32, 32>}, {pipeline_mode = #tpu.pipeline_mode<synchronous>, transform_indices = @transform_4, window_bounds = array<i64: 3, 32>}, {pipeline_mode = #tpu.pipeline_mode<synchronous>, transform_indices = @transform_5, window_bounds = array<i64: 32, 128>}, {pipeline_mode = #tpu.pipeline_mode<synchronous>, transform_indices = @transform_6, window_bounds = array<i64: 1, 128>}, {transform_indices = @transform_7, window_bounds = array<i64: 8, 128>}]} {
    %c0 = arith.constant 0 : index
    %c0_0 = arith.constant 0 : index
    %0 = vector.load %arg2[%c0, %c0_0] : memref<3x120xf32, #tpu.memory_space<vmem>>, vector<1x120xf32>
    %c1 = arith.constant 1 : index
    %c0_1 = arith.constant 0 : index
    %1 = vector.load %arg2[%c1, %c0_1] : memref<3x120xf32, #tpu.memory_space<vmem>>, vector<1x120xf32>
    %c2 = arith.constant 2 : index
    %c0_2 = arith.constant 0 : index
    %2 = vector.load %arg2[%c2, %c0_2] : memref<3x120xf32, #tpu.memory_space<vmem>>, vector<1x120xf32>
    %c0_3 = arith.constant 0 : index
    %c0_4 = arith.constant 0 : index
    %3 = vector.load %arg1[%c0_3, %c0_4] : memref<8x120xf32, #tpu.memory_space<vmem>>, vector<8x120xf32>
    %4 = vector.broadcast %0 : vector<1x120xf32> to vector<8x120xf32>
    %5 = arith.mulf %3, %4 : vector<8x120xf32>
    %6 = vector.broadcast %1 : vector<1x120xf32> to vector<8x120xf32>
    %7 = arith.mulf %6, %5 : vector<8x120xf32>
    %8 = math.cos %5 : vector<8x120xf32>
    %9 = vector.broadcast %2 : vector<1x120xf32> to vector<8x120xf32>
    %10 = arith.mulf %9, %8 : vector<8x120xf32>
    %11 = arith.addf %7, %10 : vector<8x120xf32>
    %cst = arith.constant 1.000000e+00 : f32
    %12 = vector.broadcast %cst : f32 to vector<1x120xf32>
    %13 = arith.subf %12, %1 : vector<1x120xf32>
    %14 = arith.subf %13, %2 : vector<1x120xf32>
    %15 = math.sin %5 : vector<8x120xf32>
    %16 = vector.broadcast %14 : vector<1x120xf32> to vector<8x120xf32>
    %17 = arith.mulf %16, %15 : vector<8x120xf32>
    %18 = arith.addf %11, %17 : vector<8x120xf32>
    %c0_5 = arith.constant 0 : index
    %c0_6 = arith.constant 0 : index
    %19 = vector.load %arg3[%c0_5, %c0_6] : memref<120x32xf32, #tpu.memory_space<vmem>>, vector<120x32xf32>
    %cst_7 = arith.constant dense<0.000000e+00> : vector<8x32xf32>
    %20 = tpu.matmul %18, %19, %cst_7 {dimension_numbers = #tpu.dot_dimension_numbers<[1], [0], [0], [1], [0, 0, 1, 1], [], []>} : vector<8x120xf32>, vector<120x32xf32>, vector<8x32xf32> -> vector<8x32xf32>
    %c0_8 = arith.constant 0 : index
    %c0_9 = arith.constant 0 : index
    %21 = vector.load %arg5[%c0_8, %c0_9] : memref<3x32xf32, #tpu.memory_space<vmem>>, vector<1x32xf32>
    %22 = vector.broadcast %21 : vector<1x32xf32> to vector<8x32xf32>
    %23 = arith.addf %20, %22 : vector<8x32xf32>
    %cst_10 = arith.constant 2.000000e-01 : f32
    %24 = vector.broadcast %cst_10 : f32 to vector<8x32xf32>
    %25 = arith.mulf %24, %23 : vector<8x32xf32>
    %26 = arith.maximumf %23, %25 : vector<8x32xf32>
    %c0_11 = arith.constant 0 : index
    %c0_12 = arith.constant 0 : index
    %c0_13 = arith.constant 0 : index
    %27 = vector.load %arg4[%c0_11, %c0_12, %c0_13] : memref<2x32x32xf32, #tpu.memory_space<vmem>>, vector<1x32x32xf32>
    %28 = vector.shape_cast %27 : vector<1x32x32xf32> to vector<32x32xf32>
    %cst_14 = arith.constant dense<0.000000e+00> : vector<8x32xf32>
    %29 = tpu.matmul %26, %28, %cst_14 {dimension_numbers = #tpu.dot_dimension_numbers<[1], [0], [0], [1], [0, 0, 1, 1], [], []>} : vector<8x32xf32>, vector<32x32xf32>, vector<8x32xf32> -> vector<8x32xf32>
    %c1_15 = arith.constant 1 : index
    %c0_16 = arith.constant 0 : index
    %30 = vector.load %arg5[%c1_15, %c0_16] : memref<3x32xf32, #tpu.memory_space<vmem>>, vector<1x32xf32>
    %31 = vector.broadcast %30 : vector<1x32xf32> to vector<8x32xf32>
    %32 = arith.addf %29, %31 : vector<8x32xf32>
    %cst_17 = arith.constant 2.000000e-01 : f32
    %33 = vector.broadcast %cst_17 : f32 to vector<8x32xf32>
    %34 = arith.mulf %33, %32 : vector<8x32xf32>
    %35 = arith.maximumf %32, %34 : vector<8x32xf32>
    %c1_18 = arith.constant 1 : index
    %c0_19 = arith.constant 0 : index
    %c0_20 = arith.constant 0 : index
    %36 = vector.load %arg4[%c1_18, %c0_19, %c0_20] : memref<2x32x32xf32, #tpu.memory_space<vmem>>, vector<1x32x32xf32>
    %37 = vector.shape_cast %36 : vector<1x32x32xf32> to vector<32x32xf32>
    %cst_21 = arith.constant dense<0.000000e+00> : vector<8x32xf32>
    %38 = tpu.matmul %35, %37, %cst_21 {dimension_numbers = #tpu.dot_dimension_numbers<[1], [0], [0], [1], [0, 0, 1, 1], [], []>} : vector<8x32xf32>, vector<32x32xf32>, vector<8x32xf32> -> vector<8x32xf32>
    %c2_22 = arith.constant 2 : index
    %c0_23 = arith.constant 0 : index
    %39 = vector.load %arg5[%c2_22, %c0_23] : memref<3x32xf32, #tpu.memory_space<vmem>>, vector<1x32xf32>
    %40 = vector.broadcast %39 : vector<1x32xf32> to vector<8x32xf32>
    %41 = arith.addf %38, %40 : vector<8x32xf32>
    %cst_24 = arith.constant 2.000000e-01 : f32
    %42 = vector.broadcast %cst_24 : f32 to vector<8x32xf32>
    %43 = arith.mulf %42, %41 : vector<8x32xf32>
    %44 = arith.maximumf %41, %43 : vector<8x32xf32>
    %c0_25 = arith.constant 0 : index
    %c0_26 = arith.constant 0 : index
    %45 = vector.load %arg6[%c0_25, %c0_26] : memref<32x128xf32, #tpu.memory_space<vmem>>, vector<32x128xf32>
    %cst_27 = arith.constant dense<0.000000e+00> : vector<8x128xf32>
    %46 = tpu.matmul %44, %45, %cst_27 {dimension_numbers = #tpu.dot_dimension_numbers<[1], [0], [0], [1], [0, 0, 1, 1], [], []>} : vector<8x32xf32>, vector<32x128xf32>, vector<8x128xf32> -> vector<8x128xf32>
    %c0_28 = arith.constant 0 : index
    %c0_29 = arith.constant 0 : index
    %47 = vector.load %arg7[%c0_28, %c0_29] : memref<1x128xf32, #tpu.memory_space<vmem>>, vector<1x128xf32>
    %48 = vector.broadcast %47 : vector<1x128xf32> to vector<8x128xf32>
    %49 = arith.addf %46, %48 : vector<8x128xf32>
    %c0_30 = arith.constant 0 : index
    %c0_31 = arith.constant 0 : index
    %50 = vector.load %arg8[%c0_30, %c0_31] : memref<8x128xf32, #tpu.memory_space<vmem>>, vector<8x128xf32>
    tpu.vector_store %arg8[%c0_30, %c0_31], %49 {strides = array<i32>} : memref<8x128xf32, #tpu.memory_space<vmem>>, vector<8x128xf32>,
    return
  }
  func.func @transform_0(%arg0: i32) -> (i32, i32) {
    %c0_i32 = arith.constant 0 : i32
    %c0_i32_0 = arith.constant 0 : i32
    return %arg0, %c0_i32 : i32, i32
  }
  func.func @transform_1(%arg0: i32) -> (i32, i32) {
    %c0_i32 = arith.constant 0 : i32
    %c0_i32_0 = arith.constant 0 : i32
    %c0_i32_1 = arith.constant 0 : i32
    return %c0_i32, %c0_i32_0 : i32, i32
  }
  func.func @transform_2(%arg0: i32) -> (i32, i32) {
    %c0_i32 = arith.constant 0 : i32
    %c0_i32_0 = arith.constant 0 : i32
    %c0_i32_1 = arith.constant 0 : i32
    return %c0_i32, %c0_i32_0 : i32, i32
  }
  func.func @transform_3(%arg0: i32) -> (i32, i32, i32) {
    %c0_i32 = arith.constant 0 : i32
    %c0_i32_0 = arith.constant 0 : i32
    %c0_i32_1 = arith.constant 0 : i32
    %c0_i32_2 = arith.constant 0 : i32
    return %c0_i32, %c0_i32_0, %c0_i32_1 : i32, i32, i32
  }
  func.func @transform_4(%arg0: i32) -> (i32, i32) {
    %c0_i32 = arith.constant 0 : i32
    %c0_i32_0 = arith.constant 0 : i32
    %c0_i32_1 = arith.constant 0 : i32
    return %c0_i32, %c0_i32_0 : i32, i32
  }
  func.func @transform_5(%arg0: i32) -> (i32, i32) {
    %c0_i32 = arith.constant 0 : i32
    %c0_i32_0 = arith.constant 0 : i32
    %c0_i32_1 = arith.constant 0 : i32
    return %c0_i32, %c0_i32_0 : i32, i32
  }
  func.func @transform_6(%arg0: i32) -> (i32, i32) {
    %c0_i32 = arith.constant 0 : i32
    %c0_i32_0 = arith.constant 0 : i32
    %c0_i32_1 = arith.constant 0 : i32
    return %c0_i32, %c0_i32_0 : i32, i32
  }
  func.func @transform_7(%arg0: i32) -> (i32, i32) {
    %c0_i32 = arith.constant 0 : i32
    %c0_i32_0 = arith.constant 0 : i32
    return %arg0, %c0_i32 : i32, i32
  }
}

</mosaic_0001>

<llo_original>
// kernel: _mlp_pallas.1
$region0: #{_mlp_pallas.1}
  #allocation0 [shape = 'u32[]', space=smem, size = 0x4, offset = 0x4, fixed_abs, tag = 'smem constant byte address 0x4 - core index']
  #allocation1 [shape = 'u32[72,128]{1,0:T(1,128)}', space=vmem, size = 0x9000, scoped, tag = 'internal scratch']
  %s0 = inlined_call_operand.vmem [shape: f32[8,120], index: 0, kind: input, shape index: {}]
  %s1 = inlined_call_operand.vmem [shape: f32[3,120], index: 1, kind: input, shape index: {}]
  %s2 = inlined_call_operand.vmem [shape: f32[120,32], index: 2, kind: input, shape index: {}]
  %s3 = inlined_call_operand.vmem [shape: f32[2,32,32], index: 3, kind: input, shape index: {}]
  %s4 = inlined_call_operand.vmem [shape: f32[3,32], index: 4, kind: input, shape index: {}]
  %s5 = inlined_call_operand.vmem [shape: f32[32,128], index: 5, kind: input, shape index: {}]
  %s6 = inlined_call_operand.vmem [shape: f32[1,128], index: 6, kind: input, shape index: {}]
  %s7 = inlined_call_operand.vmem [shape: f32[8,128], index: 7, kind: output, shape index: {}]
  %s8 = sld [smem:[#allocation0]]
  $region38: #{_mlp_pallas.1} parent=0
    _
  %s10 = ssub.s32 1, %s8
  %s11 = scalar_select 0, %s10, %s8
  // Predicated region
  $region2: #{_mlp_pallas.1} parent=0 // pred_check
    _
  $region3: #{_mlp_pallas.1} parent=0 // pred_check_branch
    %13 = sbr.rel (0) target = $region5
  $region4: #{_mlp_pallas.1} parent=0 // pred_region
    _
  $region5: #{_mlp_pallas.1} parent=0 // pred_fallthru
    _
  // Predicated region
  $region6: #{_mlp_pallas.1} parent=0 // pred_check
    _
  $region7: #{_mlp_pallas.1} parent=0 // pred_check_branch
    %15 = sbr.rel (0) target = $region9
  $region8: #{_mlp_pallas.1} parent=0 // pred_region
    _
  $region9: #{_mlp_pallas.1} parent=0 // pred_fallthru
    _
  // Predicated region
  $region10: #{_mlp_pallas.1} parent=0 // pred_check
    _
  $region11: #{_mlp_pallas.1} parent=0 // pred_check_branch
    %17 = sbr.rel (0) target = $region13
  $region12: #{_mlp_pallas.1} parent=0 // pred_region
    _
  $region13: #{_mlp_pallas.1} parent=0 // pred_fallthru
    _
  // Predicated region
  $region14: #{_mlp_pallas.1} parent=0 // pred_check
    _
  $region15: #{_mlp_pallas.1} parent=0 // pred_check_branch
    %19 = sbr.rel (0) target = $region17
  $region16: #{_mlp_pallas.1} parent=0 // pred_region
    _
  $region17: #{_mlp_pallas.1} parent=0 // pred_fallthru
    _
  // Predicated region
  $region18: #{_mlp_pallas.1} parent=0 // pred_check
    _
  $region19: #{_mlp_pallas.1} parent=0 // pred_check_branch
    %21 = sbr.rel (0) target = $region21
  $region20: #{_mlp_pallas.1} parent=0 // pred_region
    _
  $region21: #{_mlp_pallas.1} parent=0 // pred_fallthru
    _
  // Predicated region
  $region22: #{_mlp_pallas.1} parent=0 // pred_check
    _
  $region23: #{_mlp_pallas.1} parent=0 // pred_check_branch
    %23 = sbr.rel (0) target = $region25
  $region24: #{_mlp_pallas.1} parent=0 // pred_region
    _
  $region25: #{_mlp_pallas.1} parent=0 // pred_fallthru
    _
  // Predicated region
  $region26: #{_mlp_pallas.1} parent=0 // pred_check
    _
  $region27: #{_mlp_pallas.1} parent=0 // pred_check_branch
    %25 = sbr.rel (0) target = $region29
  $region28: #{_mlp_pallas.1} parent=0 // pred_region
    _
  $region29: #{_mlp_pallas.1} parent=0 // pred_fallthru
    _
  %v26 = vld [vmem:[%s1] sm:$0x1]
  %v27 = vld [vmem:[%s1 + $0x1] sm:$0x1]
  %v28 = vld [vmem:[%s1 + $0x2] sm:$0x1]
  %v29 = vld [vmem:[%s0] sm:$0xff]
  %v30 = vperm.slane %v26, 0
  %v31 = vmul.f32 %v29, %v30
  %v32 = vperm.slane %v27, 0
  %v33 = vmul.f32 %v32, %v31
  %v34 = vand.u32 2147483647, %v31
  %vm35 = vcmp.le.f32.partialorder %v34, 0.7853982
  %vm36 = vcmp.lt.s32.totalorder %v31, 0
  %v37 = vand.u32 %v31, 2139095040
  %v38 = vshrl.u32 %v37, 23
  %v39 = vsub.s32 %v38, 127
  %v40 = vand.u32 2147483647, %v31
  %v41 = vand.u32 %v40, 8388607
  %v42 = vor.u32 %v41, 8388608
  %v43 = vsub.s32 0, %v42
  %v44 = vadd.s32 %v39, 1
  %vm45 = vcmp.gt.s32.totalorder %v44, 0
  %v46 = vsel %vm45, %v44, 0
  %v47 = vshrl.u32 %v46, 5
  %v48 = vand.u32 %v46, 31
  %v49 = vsub.s32 32, %v48
  %v50 = vshrl.u32 683565275, %v49
  %v51 = vshll.u32 683565275, %v48
  %v52 = vshrl.u32 2475754826, %v49
  %v53 = vor.u32 %v51, %v52
  %v54 = vshll.u32 2475754826, %v48
  %v55 = vshrl.u32 2131351028, %v49
  %v56 = vor.u32 %v54, %v55
  %v57 = vshll.u32 2131351028, %v48
  %v58 = vshrl.u32 2102212464, %v49
  %v59 = vor.u32 %v57, %v58
  %v60 = vshll.u32 2102212464, %v48
  %v61 = vshrl.u32 920167782, %v49
  %v62 = vor.u32 %v60, %v61
  %v63 = vshll.u32 920167782, %v48
  %v64 = vshrl.u32 1326507024, %v49
  %v65 = vor.u32 %v63, %v64
  %vm66 = vcmp.lt.s32.totalorder %v47, 1
  %vm67 = vcmp.lt.s32.totalorder %v47, 2
  %vm68 = vcmp.lt.s32.totalorder %v47, 3
  %vm69 = vcmp.lt.s32.totalorder %v47, 4
  %v70 = vsel %vm66, %v50, %v53
  %v71 = vsel %vm69, %v59, 2102212464
  %v72 = vsel %vm68, %v56, %v71
  %v73 = vsel %vm67, %v70, %v72
  %v74 = vsel %vm66, %v53, %v56
  %v75 = vsel %vm69, %v62, 920167782
  %v76 = vsel %vm68, %v59, %v75
  %v77 = vsel %vm67, %v74, %v76
  %v78 = vsel %vm66, %v56, %v59
  %v79 = vsel %vm69, %v65, 1326507024
  %v80 = vsel %vm68, %v62, %v79
  %v81 = vsel %vm67, %v78, %v80
  %v82 = vshll.u32 %v42, 8
  %v83 = vand.u32 %v82, 65535
  %v84 = vshrl.u32 %v82, 16
  %v85 = vand.u32 %v81, 65535
  %v86 = vshrl.u32 %v81, 16
  %v87 = vmul.u32 %v83, %v85
  %v88 = vmul.u32 %v83, %v86
  %v89 = vmul.u32 %v84, %v85
  %v90 = vmul.u32 %v84, %v86
  %v91 = vshll.u32 %v88, 16
  %v92 = vshrl.u32 %v88, 16
  %v93 = vshll.u32 %v89, 16
  %v94 = vshrl.u32 %v89, 16
  %vm95 = vc.u32 %v87, %v91
  %v96 = vsel %vm95, 1, 0
  %v97 = vadd.s32 %v87, %v91
  %v98 = vadd.s32 %v90, %v96
  %vm99 = vc.u32 %v97, %v93
  %v100 = vsel %vm99, 1, 0
  %v101 = vadd.s32 %v97, %v93
  %v102 = vadd.s32 %v98, %v100
  %v103 = vadd.s32 %v102, %v92
  %v104 = vadd.s32 %v103, %v94
  %v105 = vand.u32 %v82, 65535
  %v106 = vshrl.u32 %v82, 16
  %v107 = vand.u32 %v77, 65535
  %v108 = vshrl.u32 %v77, 16
  %v109 = vmul.u32 %v105, %v107
  %v110 = vmul.u32 %v105, %v108
  %v111 = vmul.u32 %v106, %v107
  %v112 = vmul.u32 %v106, %v108
  %v113 = vshll.u32 %v110, 16
  %v114 = vshrl.u32 %v110, 16
  %v115 = vshll.u32 %v111, 16
  %v116 = vshrl.u32 %v111, 16
  %vm117 = vc.u32 %v109, %v113
  %v118 = vsel %vm117, 1, 0
  %v119 = vadd.s32 %v109, %v113
  %v120 = vadd.s32 %v112, %v118
  %vm121 = vc.u32 %v119, %v115
  %v122 = vsel %vm121, 1, 0
  %v123 = vadd.s32 %v119, %v115
  %v124 = vadd.s32 %v120, %v122
  %v125 = vadd.s32 %v124, %v114
  %v126 = vadd.s32 %v125, %v116
  %v127 = vmul.u32 %v82, %v73
  %v128 = vadd.s32 %v104, %v123
  %vm129 = vc.u32 %v104, %v123
  %v130 = vadd.s32 %v126, 1
  %v131 = vsel %vm129, %v130, %v126
  %v132 = vadd.s32 %v127, %v131
  %v133 = vadd.s32 %v132, 536870912
  %v134 = vshrl.u32 %v133, 30
  %v135 = vshll.u32 %v134, 30
  %v136 = vsub.s32 %v132, %v135
  %vm137 = vcmp.lt.s32.totalorder %v136, 0
  %v138 = vsub.s32 0, %v136
  %v139 = vsel %vm137, %v138, %v136
  %v140 = vclz %v139
  %v141 = vsub.s32 %v140, 2
  %vm142 = vcmp.gt.s32.totalorder 0, %v141
  %v143 = vsel %vm142, 0, %v141
  %v144 = vsub.s32 32, %v143
  %v145 = vshll.u32 %v136, %v143
  %v146 = vshrl.u32 %v128, %v144
  %v147 = vor.u32 %v145, %v146
  %v148 = vsub.s32 4294967266, %v143
  %v149 = vadd.s32 %v148, 127
  %v150 = vshll.u32 %v149, 23
  %v151 = vor.u32 4788187, %v150
  %v152 = vand.u32 2147483647, %v151
  %v154 = vcvt.s32.f32 %v147
  %v155 = vmul.f32 %v154, %v152
  %v156 = vxor.u32 %v155, 2147483648
  %v157 = vsel %vm36, %v156, %v155
  %v158 = vsub.s32 4, %v134
  %v159 = vsel %vm36, %v158, %v134
  %v160 = vsel %vm35, %v31, %v157
  %v161 = vsel %vm35, 0, %v159
  %v162 = vmul.f32 %v160, %v160
  %v163 = vmul.f32 %v162, -0.001358992
  %v164 = vadd.f32 %v163, 0.041655596
  %v165 = vmul.f32 %v162, %v164
  %v166 = vadd.f32 %v165, -0.4999988
  %v167 = vmul.f32 %v162, %v166
  %v168 = vadd.f32 1.0, %v167
  %v169 = vmul.f32 %v160, %v160
  %v170 = vmul.f32 %v169, -0.00019511016
  %v171 = vadd.f32 %v170, 0.008332121
  %v172 = vmul.f32 %v169, %v171
  %v173 = vadd.f32 %v172, -0.16666654
  %v174 = vmul.f32 %v169, %v173
  %v175 = vadd.f32 %v174, 1.0
  %v176 = vmul.f32 %v175, %v160
  %vm177 = vweird.f32 %v31
  %v178 = vand.u32 %v161, 3
  %vm179 = vcmp.lt.s32.totalorder %v178, 2
  %vm180 = vcmp.eq.s32.totalorder %v178, 0
  %v181 = vxor.u32 %v176, 2147483648
  %v182 = vsel %vm180, %v168, %v181
  %vm183 = vcmp.eq.s32.totalorder %v178, 2
  %v184 = vxor.u32 %v168, 2147483648
  %v185 = vsel %vm183, %v184, %v176
  %v186 = vsel %vm179, %v182, %v185
  %v187 = vsel %vm177, nan, %v186
  %v188 = vperm.slane %v28, 0
  %v189 = vmul.f32 %v188, %v187
  %v190 = vadd.f32 %v33, %v189
  %v191 = vsub.f32 1.0, %v27
  %v192 = vsub.f32 %v191, %v28
  %v193 = vand.u32 2147483647, %v31
  %vm194 = vcmp.le.f32.partialorder %v193, 0.7853982
  %vm195 = vcmp.lt.s32.totalorder %v31, 0
  %v196 = vand.u32 %v31, 2139095040
  %v197 = vshrl.u32 %v196, 23
  %v198 = vsub.s32 %v197, 127
  %v199 = vand.u32 2147483647, %v31
  %v200 = vand.u32 %v199, 8388607
  %v201 = vor.u32 %v200, 8388608
  %v202 = vsub.s32 0, %v201
  %v203 = vadd.s32 %v198, 1
  %vm204 = vcmp.gt.s32.totalorder %v203, 0
  %v205 = vsel %vm204, %v203, 0
  %v206 = vshrl.u32 %v205, 5
  %v207 = vand.u32 %v205, 31
  %v208 = vsub.s32 32, %v207
  %v209 = vshrl.u32 683565275, %v208
  %v210 = vshll.u32 683565275, %v207
  %v211 = vshrl.u32 2475754826, %v208
  %v212 = vor.u32 %v210, %v211
  %v213 = vshll.u32 2475754826, %v207
  %v214 = vshrl.u32 2131351028, %v208
  %v215 = vor.u32 %v213, %v214
  %v216 = vshll.u32 2131351028, %v207
  %v217 = vshrl.u32 2102212464, %v208
  %v218 = vor.u32 %v216, %v217
  %v219 = vshll.u32 2102212464, %v207
  %v220 = vshrl.u32 920167782, %v208
  %v221 = vor.u32 %v219, %v220
  %v222 = vshll.u32 920167782, %v207
  %v223 = vshrl.u32 1326507024, %v208
  %v224 = vor.u32 %v222, %v223
  %vm225 = vcmp.lt.s32.totalorder %v206, 1
  %vm226 = vcmp.lt.s32.totalorder %v206, 2
  %vm227 = vcmp.lt.s32.totalorder %v206, 3
  %vm228 = vcmp.lt.s32.totalorder %v206, 4
  %v229 = vsel %vm225, %v209, %v212
  %v230 = vsel %vm228, %v218, 2102212464
  %v231 = vsel %vm227, %v215, %v230
  %v232 = vsel %vm226, %v229, %v231
  %v233 = vsel %vm225, %v212, %v215
  %v234 = vsel %vm228, %v221, 920167782
  %v235 = vsel %vm227, %v218, %v234
  %v236 = vsel %vm226, %v233, %v235
  %v237 = vsel %vm225, %v215, %v218
  %v238 = vsel %vm228, %v224, 1326507024
  %v239 = vsel %vm227, %v221, %v238
  %v240 = vsel %vm226, %v237, %v239
  %v241 = vshll.u32 %v201, 8
  %v242 = vand.u32 %v241, 65535
  %v243 = vshrl.u32 %v241, 16
  %v244 = vand.u32 %v240, 65535
  %v245 = vshrl.u32 %v240, 16
  %v246 = vmul.u32 %v242, %v244
  %v247 = vmul.u32 %v242, %v245
  %v248 = vmul.u32 %v243, %v244
  %v249 = vmul.u32 %v243, %v245
  %v250 = vshll.u32 %v247, 16
  %v251 = vshrl.u32 %v247, 16
  %v252 = vshll.u32 %v248, 16
  %v253 = vshrl.u32 %v248, 16
  %vm254 = vc.u32 %v246, %v250
  %v255 = vsel %vm254, 1, 0
  %v256 = vadd.s32 %v246, %v250
  %v257 = vadd.s32 %v249, %v255
  %vm258 = vc.u32 %v256, %v252
  %v259 = vsel %vm258, 1, 0
  %v260 = vadd.s32 %v256, %v252
  %v261 = vadd.s32 %v257, %v259
  %v262 = vadd.s32 %v261, %v251
  %v263 = vadd.s32 %v262, %v253
  %v264 = vand.u32 %v241, 65535
  %v265 = vshrl.u32 %v241, 16
  %v266 = vand.u32 %v236, 65535
  %v267 = vshrl.u32 %v236, 16
  %v268 = vmul.u32 %v264, %v266
  %v269 = vmul.u32 %v264, %v267
  %v270 = vmul.u32 %v265, %v266
  %v271 = vmul.u32 %v265, %v267
  %v272 = vshll.u32 %v269, 16
  %v273 = vshrl.u32 %v269, 16
  %v274 = vshll.u32 %v270, 16
  %v275 = vshrl.u32 %v270, 16
  %vm276 = vc.u32 %v268, %v272
  %v277 = vsel %vm276, 1, 0
  %v278 = vadd.s32 %v268, %v272
  %v279 = vadd.s32 %v271, %v277
  %vm280 = vc.u32 %v278, %v274
  %v281 = vsel %vm280, 1, 0
  %v282 = vadd.s32 %v278, %v274
  %v283 = vadd.s32 %v279, %v281
  %v284 = vadd.s32 %v283, %v273
  %v285 = vadd.s32 %v284, %v275
  %v286 = vmul.u32 %v241, %v232
  %v287 = vadd.s32 %v263, %v282
  %vm288 = vc.u32 %v263, %v282
  %v289 = vadd.s32 %v285, 1
  %v290 = vsel %vm288, %v289, %v285
  %v291 = vadd.s32 %v286, %v290
  %v292 = vadd.s32 %v291, 536870912
  %v293 = vshrl.u32 %v292, 30
  %v294 = vshll.u32 %v293, 30
  %v295 = vsub.s32 %v291, %v294
  %vm296 = vcmp.lt.s32.totalorder %v295, 0
  %v297 = vsub.s32 0, %v295
  %v298 = vsel %vm296, %v297, %v295
  %v299 = vclz %v298
  %v300 = vsub.s32 %v299, 2
  %vm301 = vcmp.gt.s32.totalorder 0, %v300
  %v302 = vsel %vm301, 0, %v300
  %v303 = vsub.s32 32, %v302
  %v304 = vshll.u32 %v295, %v302
  %v305 = vshrl.u32 %v287, %v303
  %v306 = vor.u32 %v304, %v305
  %v307 = vsub.s32 4294967266, %v302
  %v308 = vadd.s32 %v307, 127
  %v309 = vshll.u32 %v308, 23
  %v310 = vor.u32 4788187, %v309
  %v311 = vand.u32 2147483647, %v310
  %v313 = vcvt.s32.f32 %v306
  %v314 = vmul.f32 %v313, %v311
  %v315 = vxor.u32 %v314, 2147483648
  %v316 = vsel %vm195, %v315, %v314
  %v317 = vsub.s32 4, %v293
  %v318 = vsel %vm195, %v317, %v293
  %v319 = vsel %vm194, %v31, %v316
  %v320 = vsel %vm194, 0, %v318
  %v321 = vmul.f32 %v319, %v319
  %v322 = vmul.f32 %v321, -0.001358992
  %v323 = vadd.f32 %v322, 0.041655596
  %v324 = vmul.f32 %v321, %v323
  %v325 = vadd.f32 %v324, -0.4999988
  %v326 = vmul.f32 %v321, %v325
  %v327 = vadd.f32 1.0, %v326
  %v328 = vmul.f32 %v319, %v319
  %v329 = vmul.f32 %v328, -0.00019511016
  %v330 = vadd.f32 %v329, 0.008332121
  %v331 = vmul.f32 %v328, %v330
  %v332 = vadd.f32 %v331, -0.16666654
  %v333 = vmul.f32 %v328, %v332
  %v334 = vadd.f32 %v333, 1.0
  %v335 = vmul.f32 %v334, %v319
  %vm336 = vweird.f32 %v31
  %v337 = vadd.s32 %v320, 3
  %v338 = vand.u32 %v337, 3
  %vm339 = vcmp.lt.s32.totalorder %v338, 2
  %vm340 = vcmp.eq.s32.totalorder %v338, 0
  %v341 = vxor.u32 %v335, 2147483648
  %v342 = vsel %vm340, %v327, %v341
  %vm343 = vcmp.eq.s32.totalorder %v338, 2
  %v344 = vxor.u32 %v327, 2147483648
  %v345 = vsel %vm343, %v344, %v335
  %v346 = vsel %vm339, %v342, %v345
  %v347 = vsel %vm336, nan, %v346
  %v348 = vperm.slane %v192, 0
  %v349 = vmul.f32 %v348, %v347
  %v350 = vadd.f32 %v190, %v349
  %v351 = vld [vmem:[%s2] sm:$0xff]
  %v352 = vld [vmem:[%s2 + $0x8] sm:$0xff]
  %v353 = vld [vmem:[%s2 + $0x10] sm:$0xff]
  %v354 = vld [vmem:[%s2 + $0x18] sm:$0xff]
  %v355 = vld [vmem:[%s2 + $0x20] sm:$0xff]
  %v356 = vld [vmem:[%s2 + $0x28] sm:$0xff]
  %v357 = vld [vmem:[%s2 + $0x30] sm:$0xff]
  %v358 = vld [vmem:[%s2 + $0x38] sm:$0xff]
  %v359 = vld [vmem:[%s2 + $0x40] sm:$0xff]
  %v360 = vld [vmem:[%s2 + $0x48] sm:$0xff]
  %v361 = vld [vmem:[%s2 + $0x50] sm:$0xff]
  %v362 = vld [vmem:[%s2 + $0x58] sm:$0xff]
  %v363 = vld [vmem:[%s2 + $0x60] sm:$0xff]
  %v364 = vld [vmem:[%s2 + $0x68] sm:$0xff]
  %v365 = vld [vmem:[%s2 + $0x70] sm:$0xff]
  %v366 = vld [vmem:[%s4] sm:$0x1]
  %v367 = vperm.slane %v366, 0
  %vm368 = vcmask 982016
  %v370 = vsel %vm368, %v350, 0
  %372 = vmatpush.msra.mxu0 0.0
  %373 = vmatpush.msra.mxu0 %v365
  %374 = vmatpush.msra.mxu0 %v364
  %375 = vmatpush.msra.mxu0 %v363
  %376 = vmatpush.msra.mxu0 %v362
  %377 = vmatpush.msra.mxu0 %v361
  %378 = vmatpush.msra.mxu0 %v360
  %379 = vmatpush.msra.mxu0 %v359
  %380 = vmatpush.msra.mxu0 %v358
  %381 = vmatpush.msra.mxu0 %v357
  %382 = vmatpush.msra.mxu0 %v356
  %383 = vmatpush.msra.mxu0 %v355
  %384 = vmatpush.msra.mxu0 %v354
  %385 = vmatpush.msra.mxu0 %v353
  %386 = vmatpush.msra.mxu0 %v352
  %387 = vmatpush.msra.mxu0 %v351
  %388 = vmatmul.f32.gmra.mxu0 %v370
  %v389 = vpop.f32.mrf.mxu0
  %v390 = vadd.f32 %v367, %v389
  %391 = vdwg.mxu0
  %v392 = vmul.f32 %v390, 0.2
  %v393 = vmax.f32 %v390, %v392
  %v394 = vld [vmem:[%s3] sm:$0xff]
  %v395 = vld [vmem:[%s3 + $0x8] sm:$0xff]
  %v396 = vld [vmem:[%s3 + $0x10] sm:$0xff]
  %v397 = vld [vmem:[%s3 + $0x18] sm:$0xff]
  %v398 = vld [vmem:[%s4 + $0x1] sm:$0x1]
  %v399 = vperm.slane %v398, 0
  %vm400 = vcmask 261120
  %v402 = vsel %vm400, %v393, 0
  %404 = vmatpush.msra.mxu0 0.0
  %405 = vmatpush.msra.mxu0 0.0
  %406 = vmatpush.msra.mxu0 0.0
  %407 = vmatpush.msra.mxu0 0.0
  %408 = vmatpush.msra.mxu0 0.0
  %409 = vmatpush.msra.mxu0 0.0
  %410 = vmatpush.msra.mxu0 0.0
  %411 = vmatpush.msra.mxu0 0.0
  %412 = vmatpush.msra.mxu0 0.0
  %413 = vmatpush.msra.mxu0 0.0
  %414 = vmatpush.msra.mxu0 0.0
  %415 = vmatpush.msra.mxu0 0.0
  %416 = vmatpush.msra.mxu0 %v397
  %417 = vmatpush.msra.mxu0 %v396
  %418 = vmatpush.msra.mxu0 %v395
  %419 = vmatpush.msra.mxu0 %v394
  %420 = vmatmul.f32.gmra.mxu0 %v402
  %v421 = vpop.f32.mrf.mxu0
  %v422 = vadd.f32 %v399, %v421
  %423 = vdwg.mxu0
  %v424 = vmul.f32 %v422, 0.2
  %v425 = vmax.f32 %v422, %v424
  %s426 = scalar_lea.vmem %s3, 32
  %v427 = vld [vmem:[%s426] sm:$0xff]
  %v428 = vld [vmem:[%s426 + $0x8] sm:$0xff]
  %v429 = vld [vmem:[%s426 + $0x10] sm:$0xff]
  %v430 = vld [vmem:[%s426 + $0x18] sm:$0xff]
  %v431 = vld [vmem:[%s4 + $0x2] sm:$0x1]
  %v432 = vperm.slane %v431, 0
  %v434 = vsel %vm400, %v425, 0
  %436 = vmatpush.msra.mxu0 0.0
  %437 = vmatpush.msra.mxu0 0.0
  %438 = vmatpush.msra.mxu0 0.0
  %439 = vmatpush.msra.mxu0 0.0
  %440 = vmatpush.msra.mxu0 0.0
  %441 = vmatpush.msra.mxu0 0.0
  %442 = vmatpush.msra.mxu0 0.0
  %443 = vmatpush.msra.mxu0 0.0
  %444 = vmatpush.msra.mxu0 0.0
  %445 = vmatpush.msra.mxu0 0.0
  %446 = vmatpush.msra.mxu0 0.0
  %447 = vmatpush.msra.mxu0 0.0
  %448 = vmatpush.msra.mxu0 %v430
  %449 = vmatpush.msra.mxu0 %v429
  %450 = vmatpush.msra.mxu0 %v428
  %451 = vmatpush.msra.mxu0 %v427
  %452 = vmatmul.f32.gmra.mxu0 %v434
  %v453 = vpop.f32.mrf.mxu0
  %v454 = vadd.f32 %v432, %v453
  %455 = vdwg.mxu0
  %v456 = vmul.f32 %v454, 0.2
  %v457 = vmax.f32 %v454, %v456
  %v458 = vld [vmem:[%s5] sm:$0xff]
  %v459 = vld [vmem:[%s5 + $0x8] sm:$0xff]
  %v460 = vld [vmem:[%s5 + $0x10] sm:$0xff]
  %v461 = vld [vmem:[%s5 + $0x18] sm:$0xff]
  %v462 = vld [vmem:[%s6] sm:$0x1]
  %v464 = vperm.slane %v462, 0
  %v467 = vsel %vm400, %v457, 0
  %469 = vmatpush.msra.mxu0 0.0
  %470 = vmatpush.msra.mxu0 0.0
  %471 = vmatpush.msra.mxu0 0.0
  %472 = vmatpush.msra.mxu0 0.0
  %473 = vmatpush.msra.mxu0 0.0
  %474 = vmatpush.msra.mxu0 0.0
  %475 = vmatpush.msra.mxu0 0.0
  %476 = vmatpush.msra.mxu0 0.0
  %477 = vmatpush.msra.mxu0 0.0
  %478 = vmatpush.msra.mxu0 0.0
  %479 = vmatpush.msra.mxu0 0.0
  %480 = vmatpush.msra.mxu0 0.0
  %481 = vmatpush.msra.mxu0 %v461
  %482 = vmatpush.msra.mxu0 %v460
  %483 = vmatpush.msra.mxu0 %v459
  %484 = vmatpush.msra.mxu0 %v458
  %485 = vmatmul.f32.gmra.mxu0 %v467
  %v486 = vpop.f32.mrf.mxu0
  %v487 = vadd.f32 %v464, %v486
  %488 = vdwg.mxu0
  %489 = vst [vmem:[%s7] sm:$0xff] %v487
  // Predicated region
  $region30: #{_mlp_pallas.1} parent=0 // pred_check
    _
  $region31: #{_mlp_pallas.1} parent=0 // pred_check_branch
    %491 = sbr.rel (0) target = $region33
  $region32: #{_mlp_pallas.1} parent=0 // pred_region
    _
  $region33: #{_mlp_pallas.1} parent=0 // pred_fallthru
    _
  // Predicated region
  $region34: #{_mlp_pallas.1} parent=0 // pred_check
    _
  $region35: #{_mlp_pallas.1} parent=0 // pred_check_branch
    %493 = sbr.rel (0) target = $region37
  $region36: #{_mlp_pallas.1} parent=0 // pred_region
    _
  $region37: #{_mlp_pallas.1} parent=0 // pred_fallthru
    _

</llo_original>
